<compile_context>
chip_gen: v6e
topology: v6e:2x2x1
jax: 0.10.0
libtpu: 0.0.40
codegen_flags: <defaults>
</compile_context>

<pallas_src>
import jax
import jax.numpy as jnp
from jax.experimental import pallas as pl
from jax.experimental.pallas import tpu as pltpu

BN_EPS = 1e-5
LANE = 128                                  # pad hidden/output widths to this
_MXU_TILE = 256                             # preferred batch-tile alignment
_VMEM_BUDGET = 24 * 1024 * 1024             # conservative scoped-VMEM budget
_SINGLE_BUFFER_THRESHOLD = 8 * 1024 * 1024  # single-buffer residents above this


# --------------------------------------------------------------------------- #
# Small helpers.
# --------------------------------------------------------------------------- #
def _round_up(x, m):
    return ((x + m - 1) // m) * m


def _pad2(a, rows, cols):
    r, c = a.shape
    return jnp.pad(a, ((0, rows - r), (0, cols - c)))


def _tensorcores_per_chip():
    """Best-effort detection of chips that expose 2 TensorCores (megacore)."""
    try:
        kind = jax.devices()[0].device_kind.lower()
    except Exception:
        return 1
    return 2 if ("7" in kind or "v4" in kind) else 1


def _choose_batch_tile(B, per_row_bytes, resident_vmem_bytes, *, min_grid=1,
                       vmem_budget=_VMEM_BUDGET):
    """Largest batch tile whose streamed+intermediate VMEM fits the budget.

    Prefers MXU-friendly multiples of 256 (then 128, then 8).  On multi-TC
    chips (min_grid=2) the tile is capped so the 1-D "parallel" grid has at
    least `min_grid` steps to shard across TensorCores.  On single-TC chips
    the whole batch collapses to one grid step when it fits (grid steps are a
    sequential loop there: ~0.35 us each of pure overhead).
    """
    b8 = _round_up(B, 8)
    avail = max(vmem_budget - resident_vmem_bytes, 8 * per_row_bytes)
    cap = max(8, avail // per_row_bytes)
    cap = min(cap, 4096)                      # diminishing returns past this
    if min_grid <= 1:
        if b8 <= cap:
            return b8                         # whole batch, single grid step
    else:
        cap = min(cap, max(8, pl.cdiv(B, min_grid)))
    for align in (_MXU_TILE, LANE, 8):
        tb = (cap // align) * align
        if tb >= align:
            return tb
    return 8


# --------------------------------------------------------------------------- #
# Kernel: 4 matmuls + 3 ReLUs.  BN already folded into W2/W3/W4 on the host.
# Matmul operands are cast to the stored weight dtype (bf16 fast path, f32
# exact path); accumulation, bias-add and ReLU are always f32.
# --------------------------------------------------------------------------- #
def iqm_mlp_kernel(
    x_ref,
    w1_ref, b1_ref,
    w2_ref, b2_ref,
    w3_ref, b3_ref,
    w4_ref, b4_ref,
    out_ref,
):
    wdt = w1_ref.dtype
    x = x_ref[...]
    h = jnp.dot(x.astype(wdt), w1_ref[...], preferred_element_type=jnp.float32)
    h = jnp.maximum(h + b1_ref[...], 0.0)
    h = jnp.dot(h.astype(wdt), w2_ref[...], preferred_element_type=jnp.float32)
    h = jnp.maximum(h + b2_ref[...], 0.0)
    h = jnp.dot(h.astype(wdt), w3_ref[...], preferred_element_type=jnp.float32)
    h = jnp.maximum(h + b3_ref[...], 0.0)
    out = jnp.dot(h.astype(wdt), w4_ref[...], preferred_element_type=jnp.float32)
    out_ref[...] = (out + b4_ref[...]).astype(out_ref.dtype)


# --------------------------------------------------------------------------- #
# Host-side parameter prep: BN folding (exact in eval mode) + lane padding.
# --------------------------------------------------------------------------- #
def fold_and_pad_params(params, *, weight_dtype=jnp.bfloat16, lane=LANE):
    """Fold eval-mode BN into the following Linear, zero-pad hidden/output
    widths to multiples of `lane`, and cast matmul weights to `weight_dtype`.

    Exactness: BN(relu(h)) @ W + b == relu(h) @ (scale*W) + (b + shift@W) with
    scale = gamma*rsqrt(var+eps), shift = beta - mean*scale.  Zero-padded
    rows/columns contribute 0 to every dot product and padded bias entries are
    0, so padded activation columns stay exactly 0 through the ReLUs.
    """
    w = {i: params[f"w{i}"] for i in (1, 2, 3, 4)}
    b = {i: params[f"b{i}"] for i in (1, 2, 3, 4)}
    # BN folding in f32 (exact).
    for l in (1, 2, 3):
        scale = params[f"g{l}"] * jax.lax.rsqrt(params[f"v{l}"] + BN_EPS)  # [1, C_l]
        shift = params[f"be{l}"] - params[f"m{l}"] * scale                 # [1, C_l]
        b[l + 1] = b[l + 1] + shift @ w[l + 1]
        w[l + 1] = scale.reshape(-1, 1) * w[l + 1]
    # Zero-pad every layer's output dim (and the next layer's matching input
    # dim) to a multiple of `lane`.  Input feature dim stays unpadded (the x
    # block uses the full array extent, which is legal).
    folded = {}
    in_dim = w[1].shape[0]
    for l in (1, 2, 3, 4):
        out_dim = _round_up(w[l].shape[1], lane)
        folded[f"w{l}"] = _pad2(w[l], in_dim, out_dim).astype(weight_dtype)
        folded[f"b{l}"] = _pad2(b[l], 1, out_dim)          # biases stay f32
        in_dim = out_dim
    return folded


# --------------------------------------------------------------------------- #
# Wrapper: batch-tiled 1-D "parallel" grid, weights resident in VMEM.
# --------------------------------------------------------------------------- #
def iqm_mlp_forward(x, p, *, n_classes, batch_tile=None):
    """Run the fused IQMMLP forward.

    x: [B, n_features] f32.  p: output of fold_and_pad_params.  Returns
    [B, n_classes] f32 (padded rows/columns are computed lane-dense and then
    sliced away here).
    """
    B, F = x.shape
    F1 = p["w1"].shape[1]
    F2 = p["w2"].shape[1]
    F3 = p["w3"].shape[1]
    Cp = p["w4"].shape[1]
    assert p["w2"].shape[0] == F1 and p["w3"].shape[0] == F2 and p["w4"].shape[0] == F3

    wkeys = ("w1", "b1", "w2", "b2", "w3", "b3", "w4", "b4")
    resident_bytes = sum(int(p[k].size) * p[k].dtype.itemsize for k in wkeys)
    single_buffer = resident_bytes > _SINGLE_BUFFER_THRESHOLD
    resident_vmem = resident_bytes * (1 if single_buffer else 2)

    # VMEM bytes per batch row: double-buffered streamed x/out tiles plus
    # (roughly) the f32 intermediate activations.
    per_row = 2 * 4 * (F + Cp) + 4 * (F1 + F2 + F3)

    if batch_tile is None:
        min_grid = 2 if (_tensorcores_per_chip() >= 2 and B >= 16) else 1
        TB = _choose_batch_tile(B, per_row, resident_vmem, min_grid=min_grid)
    else:
        TB = batch_tile
    assert TB >= 8 and TB % 8 == 0, "batch tile must be a positive multiple of 8"

    B_pad = _round_up(B, TB)
    grid = (B_pad // TB,)
    if B_pad != B:
        x = jnp.pad(x, ((0, B_pad - B), (0, 0)))

    row = lambda i: (i, 0)   # batch-tiled operands (x, out)
    rep = lambda i: (0, 0)   # resident operands (weights, biases)

    def resident(shape):
        if single_buffer:
            # Constant index_map -> never re-fetched; one VMEM copy is enough.
            return pl.BlockSpec(shape, rep, pipeline_mode=pl.Buffered(1))
        return pl.BlockSpec(shape, rep)

    in_specs = [
        pl.BlockSpec((TB, F), row),
        resident((F, F1)), resident((1, F1)),
        resident((F1, F2)), resident((1, F2)),
        resident((F2, F3)), resident((1, F3)),
        resident((F3, Cp)), resident((1, Cp)),
    ]
    out_specs = pl.BlockSpec((TB, Cp), row)

    # Raise the scoped-VMEM limit only when the footprint actually needs it
    # (no-op at small sizes; keeps headroom on v7x's 64 MiB VMEM).
    vmem_need = resident_vmem + TB * per_row
    cp_kwargs = {}
    if vmem_need > 12 * 1024 * 1024:
        cp_kwargs["vmem_limit_bytes"] = int(
            min(max(vmem_need * 1.25, 16 * 2**20), 48 * 2**20))

    flops = 2 * B_pad * (F * F1 + F1 * F2 + F2 * F3 + F3 * Cp)
    bytes_accessed = int(4 * (B_pad * F + B_pad * Cp) + resident_bytes)
    cost = pl.CostEstimate(flops=flops, transcendentals=0,
                           bytes_accessed=bytes_accessed)

    out = pl.pallas_call(
        iqm_mlp_kernel,
        out_shape=jax.ShapeDtypeStruct((B_pad, Cp), jnp.float32),
        grid=grid,
        in_specs=in_specs,
        out_specs=out_specs,
        compiler_params=pltpu.CompilerParams(
            dimension_semantics=("parallel",), **cp_kwargs),
        cost_estimate=cost,
    )(x, p["w1"], p["b1"], p["w2"], p["b2"], p["w3"], p["b3"], p["w4"], p["b4"])

    return out[:B, :n_classes]


# --------------------------------------------------------------------------- #
# Parameter init (test harness) and plain-JAX references.
# --------------------------------------------------------------------------- #
def init_params(key, n_features, n_classes):
    """Deterministic init matching the module's layer shapes.

    Linear weights: Xavier-normal, stored transposed as [in, out]; biases:
    small uniform (PyTorch's xavier_uniform_ on a 1-D bias is ill-defined).
    BatchNorm1d params/stats get NON-trivial values so the host-side BN
    folding is genuinely exercised by the correctness check.
    """
    dims = [
        (n_features, 4 * n_features),
        (4 * n_features, 2 * n_features),
        (2 * n_features, n_features),
        (n_features, n_classes),
    ]
    params = {}
    kit = iter(jax.random.split(key, 2 * len(dims) + 4 * 3))
    for i, (fi, fo) in enumerate(dims):
        std = (2.0 / (fi + fo)) ** 0.5
        bound = (6.0 / (fi + fo)) ** 0.5
        params[f"w{i+1}"] = std * jax.random.normal(next(kit), (fi, fo), jnp.float32)
        params[f"b{i+1}"] = jax.random.uniform(
            next(kit), (1, fo), jnp.float32, minval=-bound, maxval=bound)
    for i, (_, fo) in enumerate(dims[:3]):
        params[f"g{i+1}"] = jax.random.uniform(next(kit), (1, fo), jnp.float32, 0.5, 1.5)
        params[f"be{i+1}"] = 0.1 * jax.random.normal(next(kit), (1, fo), jnp.float32)
        params[f"m{i+1}"] = 0.1 * jax.random.normal(next(kit), (1, fo), jnp.float32)
        params[f"v{i+1}"] = jax.random.uniform(next(kit), (1, fo), jnp.float32, 0.5, 1.5)
    return params


def reference_forward(x, params):
    """Plain-JAX reference with explicit eval-mode BN (unfolded f32 params)."""
    h = x
    for i in range(1, 4):
        h = h @ params[f"w{i}"] + params[f"b{i}"]
        h = jnp.maximum(h, 0.0)
        h = params[f"g{i}"] * (h - params[f"m{i}"]) * jax.lax.rsqrt(
            params[f"v{i}"] + BN_EPS
        ) + params[f"be{i}"]
    return h @ params["w4"] + params["b4"]


def folded_reference_forward(x, p):
    """Plain-JAX reference using folded/padded params at matching precision."""
    wdt = p["w1"].dtype
    h = x
    for i in (1, 2, 3):
        h = jnp.dot(h.astype(wdt), p[f"w{i}"],
                    preferred_element_type=jnp.float32) + p[f"b{i}"]
        h = jnp.maximum(h, 0.0)
    return jnp.dot(h.astype(wdt), p["w4"],
                   preferred_element_type=jnp.float32) + p["b4"]


if __name__ == "__main__":
    n_features = 32
    n_classes = 8
    batch = 16

    key = jax.random.PRNGKey(0)
    key_x, key_p = jax.random.split(key)
    x = jax.random.normal(key_x, (batch, n_features), jnp.float32)
    params = init_params(key_p, n_features, n_classes)
    ref = reference_forward(x, params)

    # Exact path: f32 weights -> validates BN folding / padding / tiling tightly.
    p_f32 = fold_and_pad_params(params, weight_dtype=jnp.float32)
    out_f32 = jax.block_until_ready(iqm_mlp_forward(x, p_f32, n_classes=n_classes))
    assert out_f32.shape == (batch, n_classes)
    assert jnp.allclose(out_f32, ref, atol=1e-4, rtol=1e-4), "f32 path mismatch"

    # Fast path (default): bf16 matmul operands, f32 MXU accumulation.
    p_bf16 = fold_and_pad_params(params, weight_dtype=jnp.bfloat16)
    out_bf16 = jax.block_until_ready(iqm_mlp_forward(x, p_bf16, n_classes=n_classes))
    assert out_bf16.shape == (batch, n_classes)
    ref_bf16 = folded_reference_forward(x, p_bf16)[:, :n_classes]
    assert jnp.allclose(out_bf16, ref_bf16, atol=2e-3, rtol=2e-3), \
        "bf16 path mismatch vs matched-precision reference"
    assert jnp.allclose(out_bf16, ref, atol=8e-2, rtol=8e-2), \
        "bf16 path deviates too far from f32 module semantics"

    print("KERNEL_OK")
</pallas_src>

<mosaic_0001>
module attributes {stable_mosaic.version = 11 : i64} {
  func.func @iqm_mlp_kernel(%arg0: i32, %arg1: memref<16x32xf32, #tpu.memory_space<vmem>>, %arg2: memref<32x128xf32, #tpu.memory_space<vmem>>, %arg3: memref<1x128xf32, #tpu.memory_space<vmem>>, %arg4: memref<128x128xf32, #tpu.memory_space<vmem>>, %arg5: memref<1x128xf32, #tpu.memory_space<vmem>>, %arg6: memref<128x128xf32, #tpu.memory_space<vmem>>, %arg7: memref<1x128xf32, #tpu.memory_space<vmem>>, %arg8: memref<128x128xf32, #tpu.memory_space<vmem>>, %arg9: memref<1x128xf32, #tpu.memory_space<vmem>>, %arg10: memref<16x128xf32, #tpu.memory_space<vmem>>) attributes {dimension_semantics = [#tpu.dimension_semantics<parallel>], iteration_bounds = array<i64: 1>, scalar_prefetch = 0 : i64, scratch_operands = 0 : i64, tpu.core_type = #tpu.core_type<tc>, window_params = [{transform_indices = @transform_0, window_bounds = array<i64: 16, 32>}, {pipeline_mode = #tpu.pipeline_mode<synchronous>, transform_indices = @transform_1, window_bounds = array<i64: 32, 128>}, {pipeline_mode = #tpu.pipeline_mode<synchronous>, transform_indices = @transform_2, window_bounds = array<i64: 1, 128>}, {pipeline_mode = #tpu.pipeline_mode<synchronous>, transform_indices = @transform_3, window_bounds = array<i64: 128, 128>}, {pipeline_mode = #tpu.pipeline_mode<synchronous>, transform_indices = @transform_4, window_bounds = array<i64: 1, 128>}, {pipeline_mode = #tpu.pipeline_mode<synchronous>, transform_indices = @transform_5, window_bounds = array<i64: 128, 128>}, {pipeline_mode = #tpu.pipeline_mode<synchronous>, transform_indices = @transform_6, window_bounds = array<i64: 1, 128>}, {pipeline_mode = #tpu.pipeline_mode<synchronous>, transform_indices = @transform_7, window_bounds = array<i64: 128, 128>}, {pipeline_mode = #tpu.pipeline_mode<synchronous>, transform_indices = @transform_8, window_bounds = array<i64: 1, 128>}, {transform_indices = @transform_9, window_bounds = array<i64: 16, 128>}]} {
    %c0 = arith.constant 0 : index
    %c0_0 = arith.constant 0 : index
    %0 = vector.load %arg1[%c0, %c0_0] : memref<16x32xf32, #tpu.memory_space<vmem>>, vector<16x32xf32>
    %c0_1 = arith.constant 0 : index
    %c0_2 = arith.constant 0 : index
    %1 = vector.load %arg2[%c0_1, %c0_2] : memref<32x128xf32, #tpu.memory_space<vmem>>, vector<32x128xf32>
    %cst = arith.constant dense<0.000000e+00> : vector<16x128xf32>
    %2 = tpu.matmul %0, %1, %cst {dimension_numbers = #tpu.dot_dimension_numbers<[1], [0], [0], [1], [0, 0, 1, 1], [], []>} : vector<16x32xf32>, vector<32x128xf32>, vector<16x128xf32> -> vector<16x128xf32>
    %c0_3 = arith.constant 0 : index
    %c0_4 = arith.constant 0 : index
    %3 = vector.load %arg3[%c0_3, %c0_4] : memref<1x128xf32, #tpu.memory_space<vmem>>, vector<1x128xf32>
    %4 = vector.broadcast %3 : vector<1x128xf32> to vector<16x128xf32>
    %5 = arith.addf %2, %4 : vector<16x128xf32>
    %cst_5 = arith.constant 0.000000e+00 : f32
    %6 = vector.broadcast %cst_5 : f32 to vector<16x128xf32>
    %7 = arith.maximumf %5, %6 : vector<16x128xf32>
    %c0_6 = arith.constant 0 : index
    %c0_7 = arith.constant 0 : index
    %8 = vector.load %arg4[%c0_6, %c0_7] : memref<128x128xf32, #tpu.memory_space<vmem>>, vector<128x128xf32>
    %cst_8 = arith.constant dense<0.000000e+00> : vector<16x128xf32>
    %9 = tpu.matmul %7, %8, %cst_8 {dimension_numbers = #tpu.dot_dimension_numbers<[1], [0], [0], [1], [0, 0, 1, 1], [], []>} : vector<16x128xf32>, vector<128x128xf32>, vector<16x128xf32> -> vector<16x128xf32>
    %c0_9 = arith.constant 0 : index
    %c0_10 = arith.constant 0 : index
    %10 = vector.load %arg5[%c0_9, %c0_10] : memref<1x128xf32, #tpu.memory_space<vmem>>, vector<1x128xf32>
    %11 = vector.broadcast %10 : vector<1x128xf32> to vector<16x128xf32>
    %12 = arith.addf %9, %11 : vector<16x128xf32>
    %cst_11 = arith.constant 0.000000e+00 : f32
    %13 = vector.broadcast %cst_11 : f32 to vector<16x128xf32>
    %14 = arith.maximumf %12, %13 : vector<16x128xf32>
    %c0_12 = arith.constant 0 : index
    %c0_13 = arith.constant 0 : index
    %15 = vector.load %arg6[%c0_12, %c0_13] : memref<128x128xf32, #tpu.memory_space<vmem>>, vector<128x128xf32>
    %cst_14 = arith.constant dense<0.000000e+00> : vector<16x128xf32>
    %16 = tpu.matmul %14, %15, %cst_14 {dimension_numbers = #tpu.dot_dimension_numbers<[1], [0], [0], [1], [0, 0, 1, 1], [], []>} : vector<16x128xf32>, vector<128x128xf32>, vector<16x128xf32> -> vector<16x128xf32>
    %c0_15 = arith.constant 0 : index
    %c0_16 = arith.constant 0 : index
    %17 = vector.load %arg7[%c0_15, %c0_16] : memref<1x128xf32, #tpu.memory_space<vmem>>, vector<1x128xf32>
    %18 = vector.broadcast %17 : vector<1x128xf32> to vector<16x128xf32>
    %19 = arith.addf %16, %18 : vector<16x128xf32>
    %cst_17 = arith.constant 0.000000e+00 : f32
    %20 = vector.broadcast %cst_17 : f32 to vector<16x128xf32>
    %21 = arith.maximumf %19, %20 : vector<16x128xf32>
    %c0_18 = arith.constant 0 : index
    %c0_19 = arith.constant 0 : index
    %22 = vector.load %arg8[%c0_18, %c0_19] : memref<128x128xf32, #tpu.memory_space<vmem>>, vector<128x128xf32>
    %cst_20 = arith.constant dense<0.000000e+00> : vector<16x128xf32>
    %23 = tpu.matmul %21, %22, %cst_20 {dimension_numbers = #tpu.dot_dimension_numbers<[1], [0], [0], [1], [0, 0, 1, 1], [], []>} : vector<16x128xf32>, vector<128x128xf32>, vector<16x128xf32> -> vector<16x128xf32>
    %c0_21 = arith.constant 0 : index
    %c0_22 = arith.constant 0 : index
    %24 = vector.load %arg9[%c0_21, %c0_22] : memref<1x128xf32, #tpu.memory_space<vmem>>, vector<1x128xf32>
    %25 = vector.broadcast %24 : vector<1x128xf32> to vector<16x128xf32>
    %26 = arith.addf %23, %25 : vector<16x128xf32>
    %c0_23 = arith.constant 0 : index
    %c0_24 = arith.constant 0 : index
    %27 = vector.load %arg10[%c0_23, %c0_24] : memref<16x128xf32, #tpu.memory_space<vmem>>, vector<16x128xf32>
    tpu.vector_store %arg10[%c0_23, %c0_24], %26 {strides = array<i32>} : memref<16x128xf32, #tpu.memory_space<vmem>>, vector<16x128xf32>,
    return
  }
  func.func @transform_0(%arg0: i32) -> (i32, i32) {
    %c0_i32 = arith.constant 0 : i32
    %c0_i32_0 = arith.constant 0 : i32
    return %arg0, %c0_i32 : i32, i32
  }
  func.func @transform_1(%arg0: i32) -> (i32, i32) {
    %c0_i32 = arith.constant 0 : i32
    %c0_i32_0 = arith.constant 0 : i32
    %c0_i32_1 = arith.constant 0 : i32
    return %c0_i32, %c0_i32_0 : i32, i32
  }
  func.func @transform_2(%arg0: i32) -> (i32, i32) {
    %c0_i32 = arith.constant 0 : i32
    %c0_i32_0 = arith.constant 0 : i32
    %c0_i32_1 = arith.constant 0 : i32
    return %c0_i32, %c0_i32_0 : i32, i32
  }
  func.func @transform_3(%arg0: i32) -> (i32, i32) {
    %c0_i32 = arith.constant 0 : i32
    %c0_i32_0 = arith.constant 0 : i32
    %c0_i32_1 = arith.constant 0 : i32
    return %c0_i32, %c0_i32_0 : i32, i32
  }
  func.func @transform_4(%arg0: i32) -> (i32, i32) {
    %c0_i32 = arith.constant 0 : i32
    %c0_i32_0 = arith.constant 0 : i32
    %c0_i32_1 = arith.constant 0 : i32
    return %c0_i32, %c0_i32_0 : i32, i32
  }
  func.func @transform_5(%arg0: i32) -> (i32, i32) {
    %c0_i32 = arith.constant 0 : i32
    %c0_i32_0 = arith.constant 0 : i32
    %c0_i32_1 = arith.constant 0 : i32
    return %c0_i32, %c0_i32_0 : i32, i32
  }
  func.func @transform_6(%arg0: i32) -> (i32, i32) {
    %c0_i32 = arith.constant 0 : i32
    %c0_i32_0 = arith.constant 0 : i32
    %c0_i32_1 = arith.constant 0 : i32
    return %c0_i32, %c0_i32_0 : i32, i32
  }
  func.func @transform_7(%arg0: i32) -> (i32, i32) {
    %c0_i32 = arith.constant 0 : i32
    %c0_i32_0 = arith.constant 0 : i32
    %c0_i32_1 = arith.constant 0 : i32
    return %c0_i32, %c0_i32_0 : i32, i32
  }
  func.func @transform_8(%arg0: i32) -> (i32, i32) {
    %c0_i32 = arith.constant 0 : i32
    %c0_i32_0 = arith.constant 0 : i32
    %c0_i32_1 = arith.constant 0 : i32
    return %c0_i32, %c0_i32_0 : i32, i32
  }
  func.func @transform_9(%arg0: i32) -> (i32, i32) {
    %c0_i32 = arith.constant 0 : i32
    %c0_i32_0 = arith.constant 0 : i32
    return %arg0, %c0_i32 : i32, i32
  }
}

</mosaic_0001>

<llo_original>
// kernel: tpu_custom_call.1
$region0: #{tpu_custom_call.1}
  #allocation0 [shape = 'u32[]', space=smem, size = 0x4, offset = 0x4, fixed_abs, tag = 'smem constant byte address 0x4 - core index']
  #allocation1 [shape = 'u32[144,128]{1,0:T(1,128)}', space=vmem, size = 0x12000, scoped, tag = 'internal scratch']
  %s0 = inlined_call_operand.hbm [shape: f32[16,32], index: 0, kind: input, shape index: {}]
  %s1 = inlined_call_operand.hbm [shape: f32[32,128], index: 1, kind: input, shape index: {}]
  %s2 = inlined_call_operand.vmem [shape: f32[1,128], index: 2, kind: input, shape index: {}]
  %s3 = inlined_call_operand.hbm [shape: f32[128,128], index: 3, kind: input, shape index: {}]
  %s4 = inlined_call_operand.vmem [shape: f32[1,128], index: 4, kind: input, shape index: {}]
  %s5 = inlined_call_operand.hbm [shape: f32[128,128], index: 5, kind: input, shape index: {}]
  %s6 = inlined_call_operand.vmem [shape: f32[1,128], index: 6, kind: input, shape index: {}]
  %s7 = inlined_call_operand.hbm [shape: f32[128,128], index: 7, kind: input, shape index: {}]
  %s8 = inlined_call_operand.vmem [shape: f32[1,128], index: 8, kind: input, shape index: {}]
  %s9 = inlined_call_operand.hbm [shape: f32[16,128], index: 9, kind: output, shape index: {}]
  %s10 = sld [smem:[#allocation0]]
  $region66: #{tpu_custom_call.1} parent=0
    _
  %s12 = ssub.s32 1, %s10
  %s13 = scalar_select 0, %s12, %s10
  $region1: #{tpu_custom_call.1} parent=0
    #allocation2 [shape = 'u8[8192]{0}', space=vmem, size = 0x2000, scoped, tag = 'input window, operand 0, single buffered']
    #allocation3 [shape = 's32[1]{0}', space=sflag, size = 0x4, scoped, tag = 'scoped memory for tpu_custom_call.1']
    #allocation4 [shape = 's32[1]{0}', space=sflag, size = 0x4, scoped, tag = 'scoped memory for tpu_custom_call.1']
    #allocation5 [shape = 'u8[16384]{0}', space=vmem, size = 0x4000, scoped, tag = 'input window, operand 1, single buffered']
    #allocation6 [shape = 's32[1]{0}', space=sflag, size = 0x4, scoped, tag = 'scoped memory for tpu_custom_call.1']
    #allocation7 [shape = 'u8[65536]{0}', space=vmem, size = 0x10000, scoped, tag = 'input window, operand 3, single buffered']
    #allocation8 [shape = 'u8[65536]{0}', space=vmem, size = 0x10000, scoped, tag = 'input window, operand 5, single buffered']
    #allocation9 [shape = 's32[1]{0}', space=sflag, size = 0x4, scoped, tag = 'scoped memory for tpu_custom_call.1']
    #allocation10 [shape = 'u8[65536]{0}', space=vmem, size = 0x10000, scoped, tag = 'input window, operand 7, single buffered']
    #allocation11 [shape = 'u8[8192]{0}', space=vmem, size = 0x2000, scoped, tag = 'output window, operand 0, single buffered']
    %14 = vsyncpa [#allocation3], 0
    %15 = vsyncpa [#allocation6], 0
    %16 = vsyncpa [#allocation9], 0
    %17 = vsyncpa [#allocation4], 0
    // Predicated region
    $region2: #{tpu_custom_call.1} parent=1 // pred_check
      _
    $region3: #{tpu_custom_call.1} parent=1 // pred_check_branch
      %19 = sbr.rel (0) target = $region5
    $region4: #{tpu_custom_call.1} parent=1 // pred_region
      %s21 = ssub.s32 256, 256
      %22 = vsyncadd [#allocation3], %s21
      %s23 = sshll.u32 [#allocation2], 4
      %s24 = int_to_ptr.vmem [resolvable:$true] %s23
      %29 = dma.hbm_to_vmem [thread:$0]  %s0, 256, %s24, [#allocation3], 128, 128, 8
    $region5: #{tpu_custom_call.1} parent=1 // pred_fallthru
      _
    // Predicated region
    $region6: #{tpu_custom_call.1} parent=1 // pred_check
      _
    $region7: #{tpu_custom_call.1} parent=1 // pred_check_branch
      %31 = sbr.rel (0) target = $region9
    $region8: #{tpu_custom_call.1} parent=1 // pred_region
      %s33 = ssub.s32 512, 512
      %34 = vsyncadd [#allocation6], %s33
      %s35 = sshll.u32 [#allocation5], 4
      %s36 = int_to_ptr.vmem [resolvable:$true] %s35
      %41 = dma.hbm_to_vmem [thread:$0]  %s1, 512, %s36, [#allocation6], 128, 128, 8
    $region9: #{tpu_custom_call.1} parent=1 // pred_fallthru
      _
    // Predicated region
    $region10: #{tpu_custom_call.1} parent=1 // pred_check
      _
    $region11: #{tpu_custom_call.1} parent=1 // pred_check_branch
      %43 = sbr.rel (0) target = $region13
    $region12: #{tpu_custom_call.1} parent=1 // pred_region
      _
    $region13: #{tpu_custom_call.1} parent=1 // pred_fallthru
      _
    // Predicated region
    $region14: #{tpu_custom_call.1} parent=1 // pred_check
      _
    $region15: #{tpu_custom_call.1} parent=1 // pred_check_branch
      %45 = sbr.rel (0) target = $region17
    $region16: #{tpu_custom_call.1} parent=1 // pred_region
      %s47 = ssub.s32 2048, 2048
      %48 = vsyncadd [#allocation6], %s47
      %s49 = sshll.u32 [#allocation7], 4
      %s50 = int_to_ptr.vmem [resolvable:$true] %s49
      %55 = dma.hbm_to_vmem [thread:$0]  %s3, 2048, %s50, [#allocation6], 128, 128, 8
    $region17: #{tpu_custom_call.1} parent=1 // pred_fallthru
      _
    // Predicated region
    $region18: #{tpu_custom_call.1} parent=1 // pred_check
      _
    $region19: #{tpu_custom_call.1} parent=1 // pred_check_branch
      %57 = sbr.rel (0) target = $region21
    $region20: #{tpu_custom_call.1} parent=1 // pred_region
      _
    $region21: #{tpu_custom_call.1} parent=1 // pred_fallthru
      _
    // Predicated region
    $region22: #{tpu_custom_call.1} parent=1 // pred_check
      _
    $region23: #{tpu_custom_call.1} parent=1 // pred_check_branch
      %59 = sbr.rel (0) target = $region25
    $region24: #{tpu_custom_call.1} parent=1 // pred_region
      %s61 = ssub.s32 2048, 2048
      %62 = vsyncadd [#allocation9], %s61
      %s63 = sshll.u32 [#allocation8], 4
      %s64 = int_to_ptr.vmem [resolvable:$true] %s63
      %69 = dma.hbm_to_vmem [thread:$0]  %s5, 2048, %s64, [#allocation9], 128, 128, 8
    $region25: #{tpu_custom_call.1} parent=1 // pred_fallthru
      _
    // Predicated region
    $region26: #{tpu_custom_call.1} parent=1 // pred_check
      _
    $region27: #{tpu_custom_call.1} parent=1 // pred_check_branch
      %71 = sbr.rel (0) target = $region29
    $region28: #{tpu_custom_call.1} parent=1 // pred_region
      _
    $region29: #{tpu_custom_call.1} parent=1 // pred_fallthru
      _
    // Predicated region
    $region30: #{tpu_custom_call.1} parent=1 // pred_check
      _
    $region31: #{tpu_custom_call.1} parent=1 // pred_check_branch
      %73 = sbr.rel (0) target = $region33
    $region32: #{tpu_custom_call.1} parent=1 // pred_region
      %s75 = ssub.s32 2048, 2048
      %76 = vsyncadd [#allocation9], %s75
      %s77 = sshll.u32 [#allocation10], 4
      %s78 = int_to_ptr.vmem [resolvable:$true] %s77
      %83 = dma.hbm_to_vmem [thread:$0]  %s7, 2048, %s78, [#allocation9], 128, 128, 8
    $region33: #{tpu_custom_call.1} parent=1 // pred_fallthru
      _
    // Predicated region
    $region34: #{tpu_custom_call.1} parent=1 // pred_check
      _
    $region35: #{tpu_custom_call.1} parent=1 // pred_check_branch
      %85 = sbr.rel (0) target = $region37
    $region36: #{tpu_custom_call.1} parent=1 // pred_region
      _
    $region37: #{tpu_custom_call.1} parent=1 // pred_fallthru
      _
    // Predicated region
    $region38: #{tpu_custom_call.1} parent=1 // pred_check
      _
    $region39: #{tpu_custom_call.1} parent=1 // pred_check_branch
      %87 = sbr.rel (0) target = $region41
    $region40: #{tpu_custom_call.1} parent=1 // pred_region
      %88 = dma.done [#allocation3], 256
    $region41: #{tpu_custom_call.1} parent=1 // pred_fallthru
      _
    // Predicated region
    $region42: #{tpu_custom_call.1} parent=1 // pred_check
      _
    $region43: #{tpu_custom_call.1} parent=1 // pred_check_branch
      %90 = sbr.rel (0) target = $region45
    $region44: #{tpu_custom_call.1} parent=1 // pred_region
      %91 = dma.done [#allocation6], 512
    $region45: #{tpu_custom_call.1} parent=1 // pred_fallthru
      _
    // Predicated region
    $region46: #{tpu_custom_call.1} parent=1 // pred_check
      _
    $region47: #{tpu_custom_call.1} parent=1 // pred_check_branch
      %93 = sbr.rel (0) target = $region49
    $region48: #{tpu_custom_call.1} parent=1 // pred_region
      %94 = dma.done [#allocation6], 2048
    $region49: #{tpu_custom_call.1} parent=1 // pred_fallthru
      _
    // Predicated region
    $region50: #{tpu_custom_call.1} parent=1 // pred_check
      _
    $region51: #{tpu_custom_call.1} parent=1 // pred_check_branch
      %96 = sbr.rel (0) target = $region53
    $region52: #{tpu_custom_call.1} parent=1 // pred_region
      %97 = dma.done [#allocation9], 2048
    $region53: #{tpu_custom_call.1} parent=1 // pred_fallthru
      _
    // Predicated region
    $region54: #{tpu_custom_call.1} parent=1 // pred_check
      _
    $region55: #{tpu_custom_call.1} parent=1 // pred_check_branch
      %99 = sbr.rel (0) target = $region57
    $region56: #{tpu_custom_call.1} parent=1 // pred_region
      %100 = dma.done [#allocation9], 2048
    $region57: #{tpu_custom_call.1} parent=1 // pred_fallthru
      _
    %v101 = vld [vmem:[#allocation2] sm:$0xff]
    %v102 = vld [vmem:[#allocation2 + $0x8] sm:$0xff]
    %v103 = vld [vmem:[#allocation5] sm:$0xff]
    %v104 = vld [vmem:[#allocation5 + $0x8] sm:$0xff]
    %v105 = vld [vmem:[#allocation5 + $0x10] sm:$0xff]
    %v106 = vld [vmem:[#allocation5 + $0x18] sm:$0xff]
    %v107 = vld [vmem:[%s2] sm:$0x1]
    %v109 = vlaneseq
    %v110 = vshrl.u32 %v109, 7
    %v111 = vsub.s32 0, %v110
    %v112 = vrot.slane %v107, %v111
    %vm114 = vcmask 261120
    %v116 = vsel %vm114, %v101, 0
    %v119 = vsel %vm114, %v102, 0
    %121 = vmatprep.subr.mxu0 0.0
    %122 = vmatpush1.msra.mxu0 0.0
    %123 = vmatprep.subr.mxu0 0.0
    %124 = vmatpush1.msra.mxu0 0.0
    %125 = vmatprep.subr.mxu0 0.0
    %126 = vmatpush1.msra.mxu0 0.0
    %127 = vmatprep.subr.mxu0 0.0
    %128 = vmatpush1.msra.mxu0 0.0
    %129 = vmatprep.subr.mxu0 0.0
    %130 = vmatpush1.msra.mxu0 0.0
    %131 = vmatprep.subr.mxu0 0.0
    %132 = vmatpush1.msra.mxu0 0.0
    %133 = vmatprep.subr.mxu0 0.0
    %134 = vmatpush1.msra.mxu0 0.0
    %135 = vmatprep.subr.mxu0 0.0
    %136 = vmatpush1.msra.mxu0 0.0
    %137 = vmatprep.subr.mxu0 0.0
    %138 = vmatpush1.msra.mxu0 0.0
    %139 = vmatprep.subr.mxu0 0.0
    %140 = vmatpush1.msra.mxu0 0.0
    %141 = vmatprep.subr.mxu0 0.0
    %142 = vmatpush1.msra.mxu0 0.0
    %143 = vmatprep.subr.mxu0 0.0
    %144 = vmatpush1.msra.mxu0 0.0
    %145 = vmatprep.subr.mxu0 0.0
    %146 = vmatpush1.msra.mxu0 %v106
    %147 = vmatprep.subr.mxu0 0.0
    %148 = vmatpush1.msra.mxu0 %v105
    %149 = vmatprep.subr.mxu0 0.0
    %150 = vmatpush1.msra.mxu0 %v104
    %151 = vmatprep.subr.mxu0 0.0
    %152 = vmatpush1.msra.mxu0 %v103
    %153 = vmatprep.subr.mxu0 0.0
    %154 = vmatpush2.msra.mxu0 0.0
    %155 = vmatprep.subr.mxu0 0.0
    %156 = vmatpush2.msra.mxu0 0.0
    %157 = vmatprep.subr.mxu0 0.0
    %158 = vmatpush2.msra.mxu0 0.0
    %159 = vmatprep.subr.mxu0 0.0
    %160 = vmatpush2.msra.mxu0 0.0
    %161 = vmatprep.subr.mxu0 0.0
    %162 = vmatpush2.msra.mxu0 0.0
    %163 = vmatprep.subr.mxu0 0.0
    %164 = vmatpush2.msra.mxu0 0.0
    %165 = vmatprep.subr.mxu0 0.0
    %166 = vmatpush2.msra.mxu0 0.0
    %167 = vmatprep.subr.mxu0 0.0
    %168 = vmatpush2.msra.mxu0 0.0
    %169 = vmatprep.subr.mxu0 0.0
    %170 = vmatpush2.msra.mxu0 0.0
    %171 = vmatprep.subr.mxu0 0.0
    %172 = vmatpush2.msra.mxu0 0.0
    %173 = vmatprep.subr.mxu0 0.0
    %174 = vmatpush2.msra.mxu0 0.0
    %175 = vmatprep.subr.mxu0 0.0
    %176 = vmatpush2.msra.mxu0 0.0
    %177 = vmatprep.subr.mxu0 0.0
    %178 = vmatpush2.msra.mxu0 0.0
    %179 = vmatprep.subr.mxu0 0.0
    %180 = vmatpush2.msra.mxu0 0.0
    %181 = vmatprep.subr.mxu0 0.0
    %182 = vmatpush2.msra.mxu0 0.0
    %183 = vmatprep.subr.mxu0 0.0
    %184 = vmatpush2.msra.mxu0 0.0
    %185 = vmatprep.mubr.f32.mxu0 0.0
    %186 = vmatmul.mubr.f32.gmra.mxu0 %v116
    %v187 = vpop.f32.mrf.mxu0
    %v188 = vadd.f32 %v112, %v187
    %v189 = vpop.f32.mrf.mxu0
    %190 = vmatprep.mubr.f32.mxu0 0.0
    %191 = vmatmul.mubr.f32.gmra.mxu0 %v119
    %v192 = vpop.f32.mrf.mxu0
    %v193 = vadd.f32 %v112, %v192
    %v194 = vpop.f32.mrf.mxu0
    %195 = vdwg.mxu0
    %v196 = vmax.f32 %v188, 0.0
    %v197 = vmax.f32 %v193, 0.0
    %v198 = vld [vmem:[#allocation7] sm:$0xff]
    %v199 = vld [vmem:[#allocation7 + $0x8] sm:$0xff]
    %v200 = vld [vmem:[#allocation7 + $0x10] sm:$0xff]
    %v201 = vld [vmem:[#allocation7 + $0x18] sm:$0xff]
    %v202 = vld [vmem:[#allocation7 + $0x20] sm:$0xff]
    %v203 = vld [vmem:[#allocation7 + $0x28] sm:$0xff]
    %v204 = vld [vmem:[#allocation7 + $0x30] sm:$0xff]
    %v205 = vld [vmem:[#allocation7 + $0x38] sm:$0xff]
    %v206 = vld [vmem:[#allocation7 + $0x40] sm:$0xff]
    %v207 = vld [vmem:[#allocation7 + $0x48] sm:$0xff]
    %v208 = vld [vmem:[#allocation7 + $0x50] sm:$0xff]
    %v209 = vld [vmem:[#allocation7 + $0x58] sm:$0xff]
    %v210 = vld [vmem:[#allocation7 + $0x60] sm:$0xff]
    %v211 = vld [vmem:[#allocation7 + $0x68] sm:$0xff]
    %v212 = vld [vmem:[#allocation7 + $0x70] sm:$0xff]
    %v213 = vld [vmem:[#allocation7 + $0x78] sm:$0xff]
    %v214 = vld [vmem:[%s4] sm:$0x1]
    %v216 = vlaneseq
    %v217 = vshrl.u32 %v216, 7
    %v218 = vsub.s32 0, %v217
    %v219 = vrot.slane %v214, %v218
    %221 = vmatprep.subr.mxu0 0.0
    %222 = vmatpush1.msra.mxu0 %v213
    %223 = vmatprep.subr.mxu0 0.0
    %224 = vmatpush1.msra.mxu0 %v212
    %225 = vmatprep.subr.mxu0 0.0
    %226 = vmatpush1.msra.mxu0 %v211
    %227 = vmatprep.subr.mxu0 0.0
    %228 = vmatpush1.msra.mxu0 %v210
    %229 = vmatprep.subr.mxu0 0.0
    %230 = vmatpush1.msra.mxu0 %v209
    %231 = vmatprep.subr.mxu0 0.0
    %232 = vmatpush1.msra.mxu0 %v208
    %233 = vmatprep.subr.mxu0 0.0
    %234 = vmatpush1.msra.mxu0 %v207
    %235 = vmatprep.subr.mxu0 0.0
    %236 = vmatpush1.msra.mxu0 %v206
    %237 = vmatprep.subr.mxu0 0.0
    %238 = vmatpush1.msra.mxu0 %v205
    %239 = vmatprep.subr.mxu0 0.0
    %240 = vmatpush1.msra.mxu0 %v204
    %241 = vmatprep.subr.mxu0 0.0
    %242 = vmatpush1.msra.mxu0 %v203
    %243 = vmatprep.subr.mxu0 0.0
    %244 = vmatpush1.msra.mxu0 %v202
    %245 = vmatprep.subr.mxu0 0.0
    %246 = vmatpush1.msra.mxu0 %v201
    %247 = vmatprep.subr.mxu0 0.0
    %248 = vmatpush1.msra.mxu0 %v200
    %249 = vmatprep.subr.mxu0 0.0
    %250 = vmatpush1.msra.mxu0 %v199
    %251 = vmatprep.subr.mxu0 0.0
    %252 = vmatpush1.msra.mxu0 %v198
    %253 = vmatprep.subr.mxu0 0.0
    %254 = vmatpush2.msra.mxu0 0.0
    %255 = vmatprep.subr.mxu0 0.0
    %256 = vmatpush2.msra.mxu0 0.0
    %257 = vmatprep.subr.mxu0 0.0
    %258 = vmatpush2.msra.mxu0 0.0
    %259 = vmatprep.subr.mxu0 0.0
    %260 = vmatpush2.msra.mxu0 0.0
    %261 = vmatprep.subr.mxu0 0.0
    %262 = vmatpush2.msra.mxu0 0.0
    %263 = vmatprep.subr.mxu0 0.0
    %264 = vmatpush2.msra.mxu0 0.0
    %265 = vmatprep.subr.mxu0 0.0
    %266 = vmatpush2.msra.mxu0 0.0
    %267 = vmatprep.subr.mxu0 0.0
    %268 = vmatpush2.msra.mxu0 0.0
    %269 = vmatprep.subr.mxu0 0.0
    %270 = vmatpush2.msra.mxu0 0.0
    %271 = vmatprep.subr.mxu0 0.0
    %272 = vmatpush2.msra.mxu0 0.0
    %273 = vmatprep.subr.mxu0 0.0
    %274 = vmatpush2.msra.mxu0 0.0
    %275 = vmatprep.subr.mxu0 0.0
    %276 = vmatpush2.msra.mxu0 0.0
    %277 = vmatprep.subr.mxu0 0.0
    %278 = vmatpush2.msra.mxu0 0.0
    %279 = vmatprep.subr.mxu0 0.0
    %280 = vmatpush2.msra.mxu0 0.0
    %281 = vmatprep.subr.mxu0 0.0
    %282 = vmatpush2.msra.mxu0 0.0
    %283 = vmatprep.subr.mxu0 0.0
    %284 = vmatpush2.msra.mxu0 0.0
    %285 = vmatprep.mubr.f32.mxu0 0.0
    %286 = vmatmul.mubr.f32.gmra.mxu0 %v196
    %v287 = vpop.f32.mrf.mxu0
    %v288 = vadd.f32 %v219, %v287
    %v289 = vpop.f32.mrf.mxu0
    %290 = vmatprep.mubr.f32.mxu0 0.0
    %291 = vmatmul.mubr.f32.gmra.mxu0 %v197
    %v292 = vpop.f32.mrf.mxu0
    %v293 = vadd.f32 %v219, %v292
    %v294 = vpop.f32.mrf.mxu0
    %295 = vdwg.mxu0
    %v296 = vmax.f32 %v288, 0.0
    %v297 = vmax.f32 %v293, 0.0
    %v298 = vld [vmem:[#allocation8] sm:$0xff]
    %v299 = vld [vmem:[#allocation8 + $0x8] sm:$0xff]
    %v300 = vld [vmem:[#allocation8 + $0x10] sm:$0xff]
    %v301 = vld [vmem:[#allocation8 + $0x18] sm:$0xff]
    %v302 = vld [vmem:[#allocation8 + $0x20] sm:$0xff]
    %v303 = vld [vmem:[#allocation8 + $0x28] sm:$0xff]
    %v304 = vld [vmem:[#allocation8 + $0x30] sm:$0xff]
    %v305 = vld [vmem:[#allocation8 + $0x38] sm:$0xff]
    %v306 = vld [vmem:[#allocation8 + $0x40] sm:$0xff]
    %v307 = vld [vmem:[#allocation8 + $0x48] sm:$0xff]
    %v308 = vld [vmem:[#allocation8 + $0x50] sm:$0xff]
    %v309 = vld [vmem:[#allocation8 + $0x58] sm:$0xff]
    %v310 = vld [vmem:[#allocation8 + $0x60] sm:$0xff]
    %v311 = vld [vmem:[#allocation8 + $0x68] sm:$0xff]
    %v312 = vld [vmem:[#allocation8 + $0x70] sm:$0xff]
    %v313 = vld [vmem:[#allocation8 + $0x78] sm:$0xff]
    %v314 = vld [vmem:[%s6] sm:$0x1]
    %v316 = vlaneseq
    %v317 = vshrl.u32 %v316, 7
    %v318 = vsub.s32 0, %v317
    %v319 = vrot.slane %v314, %v318
    %321 = vmatprep.subr.mxu0 0.0
    %322 = vmatpush1.msra.mxu0 %v313
    %323 = vmatprep.subr.mxu0 0.0
    %324 = vmatpush1.msra.mxu0 %v312
    %325 = vmatprep.subr.mxu0 0.0
    %326 = vmatpush1.msra.mxu0 %v311
    %327 = vmatprep.subr.mxu0 0.0
    %328 = vmatpush1.msra.mxu0 %v310
    %329 = vmatprep.subr.mxu0 0.0
    %330 = vmatpush1.msra.mxu0 %v309
    %331 = vmatprep.subr.mxu0 0.0
    %332 = vmatpush1.msra.mxu0 %v308
    %333 = vmatprep.subr.mxu0 0.0
    %334 = vmatpush1.msra.mxu0 %v307
    %335 = vmatprep.subr.mxu0 0.0
    %336 = vmatpush1.msra.mxu0 %v306
    %337 = vmatprep.subr.mxu0 0.0
    %338 = vmatpush1.msra.mxu0 %v305
    %339 = vmatprep.subr.mxu0 0.0
    %340 = vmatpush1.msra.mxu0 %v304
    %341 = vmatprep.subr.mxu0 0.0
    %342 = vmatpush1.msra.mxu0 %v303
    %343 = vmatprep.subr.mxu0 0.0
    %344 = vmatpush1.msra.mxu0 %v302
    %345 = vmatprep.subr.mxu0 0.0
    %346 = vmatpush1.msra.mxu0 %v301
    %347 = vmatprep.subr.mxu0 0.0
    %348 = vmatpush1.msra.mxu0 %v300
    %349 = vmatprep.subr.mxu0 0.0
    %350 = vmatpush1.msra.mxu0 %v299
    %351 = vmatprep.subr.mxu0 0.0
    %352 = vmatpush1.msra.mxu0 %v298
    %353 = vmatprep.subr.mxu0 0.0
    %354 = vmatpush2.msra.mxu0 0.0
    %355 = vmatprep.subr.mxu0 0.0
    %356 = vmatpush2.msra.mxu0 0.0
    %357 = vmatprep.subr.mxu0 0.0
    %358 = vmatpush2.msra.mxu0 0.0
    %359 = vmatprep.subr.mxu0 0.0
    %360 = vmatpush2.msra.mxu0 0.0
    %361 = vmatprep.subr.mxu0 0.0
    %362 = vmatpush2.msra.mxu0 0.0
    %363 = vmatprep.subr.mxu0 0.0
    %364 = vmatpush2.msra.mxu0 0.0
    %365 = vmatprep.subr.mxu0 0.0
    %366 = vmatpush2.msra.mxu0 0.0
    %367 = vmatprep.subr.mxu0 0.0
    %368 = vmatpush2.msra.mxu0 0.0
    %369 = vmatprep.subr.mxu0 0.0
    %370 = vmatpush2.msra.mxu0 0.0
    %371 = vmatprep.subr.mxu0 0.0
    %372 = vmatpush2.msra.mxu0 0.0
    %373 = vmatprep.subr.mxu0 0.0
    %374 = vmatpush2.msra.mxu0 0.0
    %375 = vmatprep.subr.mxu0 0.0
    %376 = vmatpush2.msra.mxu0 0.0
    %377 = vmatprep.subr.mxu0 0.0
    %378 = vmatpush2.msra.mxu0 0.0
    %379 = vmatprep.subr.mxu0 0.0
    %380 = vmatpush2.msra.mxu0 0.0
    %381 = vmatprep.subr.mxu0 0.0
    %382 = vmatpush2.msra.mxu0 0.0
    %383 = vmatprep.subr.mxu0 0.0
    %384 = vmatpush2.msra.mxu0 0.0
    %385 = vmatprep.mubr.f32.mxu0 0.0
    %386 = vmatmul.mubr.f32.gmra.mxu0 %v296
    %v387 = vpop.f32.mrf.mxu0
    %v388 = vadd.f32 %v319, %v387
    %v389 = vpop.f32.mrf.mxu0
    %390 = vmatprep.mubr.f32.mxu0 0.0
    %391 = vmatmul.mubr.f32.gmra.mxu0 %v297
    %v392 = vpop.f32.mrf.mxu0
    %v393 = vadd.f32 %v319, %v392
    %v394 = vpop.f32.mrf.mxu0
    %395 = vdwg.mxu0
    %v396 = vmax.f32 %v388, 0.0
    %v397 = vmax.f32 %v393, 0.0
    %v398 = vld [vmem:[#allocation10] sm:$0xff]
    %v399 = vld [vmem:[#allocation10 + $0x8] sm:$0xff]
    %v400 = vld [vmem:[#allocation10 + $0x10] sm:$0xff]
    %v401 = vld [vmem:[#allocation10 + $0x18] sm:$0xff]
    %v402 = vld [vmem:[#allocation10 + $0x20] sm:$0xff]
    %v403 = vld [vmem:[#allocation10 + $0x28] sm:$0xff]
    %v404 = vld [vmem:[#allocation10 + $0x30] sm:$0xff]
    %v405 = vld [vmem:[#allocation10 + $0x38] sm:$0xff]
    %v406 = vld [vmem:[#allocation10 + $0x40] sm:$0xff]
    %v407 = vld [vmem:[#allocation10 + $0x48] sm:$0xff]
    %v408 = vld [vmem:[#allocation10 + $0x50] sm:$0xff]
    %v409 = vld [vmem:[#allocation10 + $0x58] sm:$0xff]
    %v410 = vld [vmem:[#allocation10 + $0x60] sm:$0xff]
    %v411 = vld [vmem:[#allocation10 + $0x68] sm:$0xff]
    %v412 = vld [vmem:[#allocation10 + $0x70] sm:$0xff]
    %v413 = vld [vmem:[#allocation10 + $0x78] sm:$0xff]
    %v414 = vld [vmem:[%s8] sm:$0x1]
    %v416 = vlaneseq
    %v417 = vshrl.u32 %v416, 7
    %v418 = vsub.s32 0, %v417
    %v419 = vrot.slane %v414, %v418
    %421 = vmatprep.subr.mxu0 0.0
    %422 = vmatpush1.msra.mxu0 %v413
    %423 = vmatprep.subr.mxu0 0.0
    %424 = vmatpush1.msra.mxu0 %v412
    %425 = vmatprep.subr.mxu0 0.0
    %426 = vmatpush1.msra.mxu0 %v411
    %427 = vmatprep.subr.mxu0 0.0
    %428 = vmatpush1.msra.mxu0 %v410
    %429 = vmatprep.subr.mxu0 0.0
    %430 = vmatpush1.msra.mxu0 %v409
    %431 = vmatprep.subr.mxu0 0.0
    %432 = vmatpush1.msra.mxu0 %v408
    %433 = vmatprep.subr.mxu0 0.0
    %434 = vmatpush1.msra.mxu0 %v407
    %435 = vmatprep.subr.mxu0 0.0
    %436 = vmatpush1.msra.mxu0 %v406
    %437 = vmatprep.subr.mxu0 0.0
    %438 = vmatpush1.msra.mxu0 %v405
    %439 = vmatprep.subr.mxu0 0.0
    %440 = vmatpush1.msra.mxu0 %v404
    %441 = vmatprep.subr.mxu0 0.0
    %442 = vmatpush1.msra.mxu0 %v403
    %443 = vmatprep.subr.mxu0 0.0
    %444 = vmatpush1.msra.mxu0 %v402
    %445 = vmatprep.subr.mxu0 0.0
    %446 = vmatpush1.msra.mxu0 %v401
    %447 = vmatprep.subr.mxu0 0.0
    %448 = vmatpush1.msra.mxu0 %v400
    %449 = vmatprep.subr.mxu0 0.0
    %450 = vmatpush1.msra.mxu0 %v399
    %451 = vmatprep.subr.mxu0 0.0
    %452 = vmatpush1.msra.mxu0 %v398
    %453 = vmatprep.subr.mxu0 0.0
    %454 = vmatpush2.msra.mxu0 0.0
    %455 = vmatprep.subr.mxu0 0.0
    %456 = vmatpush2.msra.mxu0 0.0
    %457 = vmatprep.subr.mxu0 0.0
    %458 = vmatpush2.msra.mxu0 0.0
    %459 = vmatprep.subr.mxu0 0.0
    %460 = vmatpush2.msra.mxu0 0.0
    %461 = vmatprep.subr.mxu0 0.0
    %462 = vmatpush2.msra.mxu0 0.0
    %463 = vmatprep.subr.mxu0 0.0
    %464 = vmatpush2.msra.mxu0 0.0
    %465 = vmatprep.subr.mxu0 0.0
    %466 = vmatpush2.msra.mxu0 0.0
    %467 = vmatprep.subr.mxu0 0.0
    %468 = vmatpush2.msra.mxu0 0.0
    %469 = vmatprep.subr.mxu0 0.0
    %470 = vmatpush2.msra.mxu0 0.0
    %471 = vmatprep.subr.mxu0 0.0
    %472 = vmatpush2.msra.mxu0 0.0
    %473 = vmatprep.subr.mxu0 0.0
    %474 = vmatpush2.msra.mxu0 0.0
    %475 = vmatprep.subr.mxu0 0.0
    %476 = vmatpush2.msra.mxu0 0.0
    %477 = vmatprep.subr.mxu0 0.0
    %478 = vmatpush2.msra.mxu0 0.0
    %479 = vmatprep.subr.mxu0 0.0
    %480 = vmatpush2.msra.mxu0 0.0
    %481 = vmatprep.subr.mxu0 0.0
    %482 = vmatpush2.msra.mxu0 0.0
    %483 = vmatprep.subr.mxu0 0.0
    %484 = vmatpush2.msra.mxu0 0.0
    %485 = vmatprep.mubr.f32.mxu0 0.0
    %486 = vmatmul.mubr.f32.gmra.mxu0 %v396
    %v487 = vpop.f32.mrf.mxu0
    %v488 = vadd.f32 %v419, %v487
    %v489 = vpop.f32.mrf.mxu0
    %490 = vmatprep.mubr.f32.mxu0 0.0
    %491 = vmatmul.mubr.f32.gmra.mxu0 %v397
    %v492 = vpop.f32.mrf.mxu0
    %v493 = vadd.f32 %v419, %v492
    %v494 = vpop.f32.mrf.mxu0
    %495 = vdwg.mxu0
    %496 = vst [vmem:[#allocation11] sm:$0xff] %v488
    %497 = vst [vmem:[#allocation11 + $0x8] sm:$0xff] %v493
    // Predicated region
    $region58: #{tpu_custom_call.1} parent=1 // pred_check
      _
    $region59: #{tpu_custom_call.1} parent=1 // pred_check_branch
      %499 = sbr.rel (0) target = $region61
    $region60: #{tpu_custom_call.1} parent=1 // pred_region
      %s501 = ssub.s32 256, 256
      %502 = vsyncadd [#allocation4], %s501
      %s503 = sshll.u32 [#allocation11], 4
      %s504 = int_to_ptr.vmem [resolvable:$true] %s503
      %509 = dma.vmem_to_hbm [thread:$0]  %s504, 256, %s9, [#allocation4], 128, 128, 8
    $region61: #{tpu_custom_call.1} parent=1 // pred_fallthru
      _
    // Predicated region
    $region62: #{tpu_custom_call.1} parent=1 // pred_check
      _
    $region63: #{tpu_custom_call.1} parent=1 // pred_check_branch
      %511 = sbr.rel (0) target = $region65
    $region64: #{tpu_custom_call.1} parent=1 // pred_region
      %512 = dma.done [#allocation4], 256
    $region65: #{tpu_custom_call.1} parent=1 // pred_fallthru
      _
    %513 = vsyncpa [#allocation3], 1
    %514 = vsyncpa [#allocation6], 1
    %515 = vsyncpa [#allocation9], 1
    %516 = vsyncpa [#allocation4], 1

</llo_original>
